<compile_context>
chip_gen: v7x
topology: tpu7x:2x2x1
jax: 0.10.0
libtpu: 0.0.40
codegen_flags: <defaults>
</compile_context>

<pallas_src>
import math

import jax
import jax.numpy as jnp
from jax.experimental import pallas as pl
from jax.experimental.pallas import tpu as pltpu


def _round_up(x, m):
    return ((x + m - 1) // m) * m


def critic_kernel(state_ref, action_ref,
                  w1s_ref, w1a_ref, b1_ref,
                  w2_ref, b2_ref,
                  w3_ref, b3_ref,
                  w4_ref, b4_ref,
                  q_ref):
    """Fused MLP: relu(s@W1s + a@W1a + b1) -> relu(@W2+b2) -> relu(@W3+b3) -> VPU dot w4."""
    # MXU operands in bf16, accumulation in f32.
    s = state_ref[...].astype(jnp.bfloat16)
    a = action_ref[...].astype(jnp.bfloat16)

    h1 = (jnp.dot(s, w1s_ref[...], preferred_element_type=jnp.float32)
          + jnp.dot(a, w1a_ref[...], preferred_element_type=jnp.float32)
          + b1_ref[...])
    h1 = jnp.maximum(h1, 0.0).astype(jnp.bfloat16)

    h2 = jnp.dot(h1, w2_ref[...], preferred_element_type=jnp.float32) + b2_ref[...]
    h2 = jnp.maximum(h2, 0.0).astype(jnp.bfloat16)

    h3 = jnp.dot(h2, w3_ref[...], preferred_element_type=jnp.float32) + b3_ref[...]
    h3 = jnp.maximum(h3, 0.0)  # f32, (TB, 32)

    # Final 32 -> 1 projection on the VPU (mul) + XLU (lane reduce): avoids an
    # MXU pass that would use a single output column.
    q_ref[...] = jnp.sum(h3 * w4_ref[...], axis=-1, keepdims=True) + b4_ref[...]


def critic_forward(state_list, action_list, params, *, block_b=512):
    """JAX wrapper mirroring Critic.forward.

    state_list / action_list: lists of (B, dim_i) f32 arrays (one per agent).
    params: output of make_params (action scaling already folded into w1a).
    """
    state = jnp.concatenate(state_list, axis=1).astype(jnp.float32)
    action = jnp.concatenate(action_list, axis=1).astype(jnp.float32)
    w1s, w1a, b1, w2, b2, w3, b3, w4, b4 = params

    B = state.shape[0]
    ds = state.shape[1]
    da = action.shape[1]

    # Batch tile: multiple of 8 (sublane), capped at block_b; pad batch so the
    # grid divides evenly (padded rows are sliced off at the end).
    TB = min(block_b, _round_up(B, 8))
    B_pad = _round_up(B, TB)
    if B_pad != B:
        state = jnp.pad(state, ((0, B_pad - B), (0, 0)))
        action = jnp.pad(action, ((0, B_pad - B), (0, 0)))
    grid = (B_pad // TB,)

    flops = 2 * B_pad * (ds * 512 + da * 512 + 512 * 128 + 128 * 32 + 32)
    bytes_accessed = (
        (state.size + action.size) * 4
        + sum(int(p.size) * p.dtype.itemsize for p in params)
        + B_pad * 4
    )

    q = pl.pallas_call(
        critic_kernel,
        out_shape=jax.ShapeDtypeStruct((B_pad, 1), jnp.float32),
        grid_spec=pltpu.PrefetchScalarGridSpec(
            num_scalar_prefetch=0,
            grid=grid,
            in_specs=[
                # Activations: tiled over the batch axis.
                pl.BlockSpec((TB, ds), lambda i: (i, 0)),
                pl.BlockSpec((TB, da), lambda i: (i, 0)),
                # Weights / biases: constant index_map -> DMA'd once, resident
                # across all grid steps.
                pl.BlockSpec(w1s.shape, lambda i: (0, 0)),
                pl.BlockSpec(w1a.shape, lambda i: (0, 0)),
                pl.BlockSpec(b1.shape, lambda i: (0, 0)),
                pl.BlockSpec(w2.shape, lambda i: (0, 0)),
                pl.BlockSpec(b2.shape, lambda i: (0, 0)),
                pl.BlockSpec(w3.shape, lambda i: (0, 0)),
                pl.BlockSpec(b3.shape, lambda i: (0, 0)),
                pl.BlockSpec(w4.shape, lambda i: (0, 0)),
                pl.BlockSpec(b4.shape, lambda i: (0, 0)),
            ],
            out_specs=pl.BlockSpec((TB, 1), lambda i: (i, 0)),
        ),
        compiler_params=pltpu.CompilerParams(
            dimension_semantics=("parallel",),  # shard batch tiles across TCs (v7x)
        ),
        cost_estimate=pl.CostEstimate(
            flops=flops, transcendentals=0, bytes_accessed=bytes_accessed),
    )(state, action, w1s, w1a, b1, w2, b2, w3, b3, w4, b4)

    return q[:B]


def init_linear(key, in_dim, out_dim):
    """Deterministic PyTorch-style init: U(-1/sqrt(fan_in), 1/sqrt(fan_in))."""
    kw, kb = jax.random.split(key)
    bound = 1.0 / math.sqrt(in_dim)
    w = jax.random.uniform(kw, (in_dim, out_dim), jnp.float32, -bound, bound)
    b = jax.random.uniform(kb, (1, out_dim), jnp.float32, -bound, bound)
    return w, b


def make_params(key, obs_dims, act_dims, max_action):
    """Build params; split W1 into state/action parts and fold 1/max_action
    into the action part (the PyTorch module divides actions by max_action).
    Weights are stored in bf16 for the MXU; biases stay f32."""
    ds, da = sum(obs_dims), sum(act_dims)
    in_dim = ds + da
    k1, k2, k3, k4 = jax.random.split(key, 4)
    w1, b1 = init_linear(k1, in_dim, 512)
    w2, b2 = init_linear(k2, 512, 128)
    w3, b3 = init_linear(k3, 128, 32)
    w4, b4 = init_linear(k4, 32, 1)

    w1s = w1[:ds].astype(jnp.bfloat16)                     # (ds, 512)
    w1a = (w1[ds:] / max_action).astype(jnp.bfloat16)      # (da, 512), scale folded in
    return (w1s, w1a, b1,
            w2.astype(jnp.bfloat16), b2,
            w3.astype(jnp.bfloat16), b3,
            w4.T.astype(jnp.float32),                      # (1, 32) row for VPU projection
            b4)                                            # (1, 1)


def reference_forward(state_list, action_list, params):
    """Pure-JAX reference mirroring the kernel math (bf16 MXU operands, f32 accum)."""
    state = jnp.concatenate(state_list, axis=1).astype(jnp.float32)
    action = jnp.concatenate(action_list, axis=1).astype(jnp.float32)
    w1s, w1a, b1, w2, b2, w3, b3, w4, b4 = params
    s = state.astype(jnp.bfloat16)
    a = action.astype(jnp.bfloat16)
    h1 = jnp.maximum(
        jnp.dot(s, w1s, preferred_element_type=jnp.float32)
        + jnp.dot(a, w1a, preferred_element_type=jnp.float32) + b1, 0.0)
    h2 = jnp.maximum(
        jnp.dot(h1.astype(jnp.bfloat16), w2, preferred_element_type=jnp.float32) + b2, 0.0)
    h3 = jnp.maximum(
        jnp.dot(h2.astype(jnp.bfloat16), w3, preferred_element_type=jnp.float32) + b3, 0.0)
    return jnp.sum(h3 * w4, axis=-1, keepdims=True) + b4


if __name__ == "__main__":
    key = jax.random.PRNGKey(0)

    # Small synthetic MADDPG setup: 3 agents, obs_shape=[6,6,6], action_shape=[5,5,5].
    n_agents = 3
    obs_dims = [6, 6, 6]
    act_dims = [5, 5, 5]
    max_action = 1.0
    batch = 10  # not a multiple of 8 on purpose: exercises the batch-pad path

    keys = jax.random.split(key, 1 + 2 * n_agents)
    params = make_params(keys[0], obs_dims, act_dims, max_action)
    state_list = [
        jax.random.normal(keys[1 + i], (batch, obs_dims[i]), jnp.float32)
        for i in range(n_agents)
    ]
    action_list = [
        jax.random.normal(keys[1 + n_agents + i], (batch, act_dims[i]), jnp.float32)
        for i in range(n_agents)
    ]

    q = critic_forward(state_list, action_list, params)
    q = jax.block_until_ready(q)

    q_ref = reference_forward(state_list, action_list, params)
    assert q.shape == (batch, 1)
    assert jnp.allclose(q, q_ref, atol=2e-3, rtol=2e-3), "mismatch vs reference"

    print("KERNEL_OK")
</pallas_src>

<mosaic_0001>
module attributes {stable_mosaic.version = 11 : i64} {
  func.func @critic_kernel(%arg0: i32, %arg1: memref<16x18xf32, #tpu.memory_space<vmem>>, %arg2: memref<16x15xf32, #tpu.memory_space<vmem>>, %arg3: memref<18x512xbf16, #tpu.memory_space<vmem>>, %arg4: memref<15x512xbf16, #tpu.memory_space<vmem>>, %arg5: memref<1x512xf32, #tpu.memory_space<vmem>>, %arg6: memref<512x128xbf16, #tpu.memory_space<vmem>>, %arg7: memref<1x128xf32, #tpu.memory_space<vmem>>, %arg8: memref<128x32xbf16, #tpu.memory_space<vmem>>, %arg9: memref<1x32xf32, #tpu.memory_space<vmem>>, %arg10: memref<1x32xf32, #tpu.memory_space<vmem>>, %arg11: memref<1x1xf32, #tpu.memory_space<vmem>>, %arg12: memref<16x1xf32, #tpu.memory_space<vmem>>) attributes {dimension_semantics = [#tpu.dimension_semantics<parallel>], iteration_bounds = array<i64: 1>, scalar_prefetch = 0 : i64, scratch_operands = 0 : i64, tpu.core_type = #tpu.core_type<tc>, window_params = [{transform_indices = @transform_0, window_bounds = array<i64: 16, 18>}, {transform_indices = @transform_1, window_bounds = array<i64: 16, 15>}, {pipeline_mode = #tpu.pipeline_mode<synchronous>, transform_indices = @transform_2, window_bounds = array<i64: 18, 512>}, {pipeline_mode = #tpu.pipeline_mode<synchronous>, transform_indices = @transform_3, window_bounds = array<i64: 15, 512>}, {pipeline_mode = #tpu.pipeline_mode<synchronous>, transform_indices = @transform_4, window_bounds = array<i64: 1, 512>}, {pipeline_mode = #tpu.pipeline_mode<synchronous>, transform_indices = @transform_5, window_bounds = array<i64: 512, 128>}, {pipeline_mode = #tpu.pipeline_mode<synchronous>, transform_indices = @transform_6, window_bounds = array<i64: 1, 128>}, {pipeline_mode = #tpu.pipeline_mode<synchronous>, transform_indices = @transform_7, window_bounds = array<i64: 128, 32>}, {pipeline_mode = #tpu.pipeline_mode<synchronous>, transform_indices = @transform_8, window_bounds = array<i64: 1, 32>}, {pipeline_mode = #tpu.pipeline_mode<synchronous>, transform_indices = @transform_9, window_bounds = array<i64: 1, 32>}, {pipeline_mode = #tpu.pipeline_mode<synchronous>, transform_indices = @transform_10, window_bounds = array<i64: 1, 1>}, {transform_indices = @transform_11, window_bounds = array<i64: 16, 1>}]} {
    %c0 = arith.constant 0 : index
    %c0_0 = arith.constant 0 : index
    %0 = vector.load %arg1[%c0, %c0_0] : memref<16x18xf32, #tpu.memory_space<vmem>>, vector<16x18xf32>
    %1 = arith.truncf %0 : vector<16x18xf32> to vector<16x18xbf16>
    %c0_1 = arith.constant 0 : index
    %c0_2 = arith.constant 0 : index
    %2 = vector.load %arg2[%c0_1, %c0_2] : memref<16x15xf32, #tpu.memory_space<vmem>>, vector<16x15xf32>
    %3 = arith.truncf %2 : vector<16x15xf32> to vector<16x15xbf16>
    %c0_3 = arith.constant 0 : index
    %c0_4 = arith.constant 0 : index
    %4 = vector.load %arg3[%c0_3, %c0_4] : memref<18x512xbf16, #tpu.memory_space<vmem>>, vector<18x512xbf16>
    %cst = arith.constant dense<0.000000e+00> : vector<16x512xf32>
    %5 = tpu.matmul %1, %4, %cst {dimension_numbers = #tpu.dot_dimension_numbers<[1], [0], [0], [1], [0, 0, 1, 1], [], []>} : vector<16x18xbf16>, vector<18x512xbf16>, vector<16x512xf32> -> vector<16x512xf32>
    %c0_5 = arith.constant 0 : index
    %c0_6 = arith.constant 0 : index
    %6 = vector.load %arg4[%c0_5, %c0_6] : memref<15x512xbf16, #tpu.memory_space<vmem>>, vector<15x512xbf16>
    %cst_7 = arith.constant dense<0.000000e+00> : vector<16x512xf32>
    %7 = tpu.matmul %3, %6, %cst_7 {dimension_numbers = #tpu.dot_dimension_numbers<[1], [0], [0], [1], [0, 0, 1, 1], [], []>} : vector<16x15xbf16>, vector<15x512xbf16>, vector<16x512xf32> -> vector<16x512xf32>
    %8 = arith.addf %5, %7 : vector<16x512xf32>
    %c0_8 = arith.constant 0 : index
    %c0_9 = arith.constant 0 : index
    %9 = vector.load %arg5[%c0_8, %c0_9] : memref<1x512xf32, #tpu.memory_space<vmem>>, vector<1x512xf32>
    %10 = vector.broadcast %9 : vector<1x512xf32> to vector<16x512xf32>
    %11 = arith.addf %8, %10 : vector<16x512xf32>
    %cst_10 = arith.constant 0.000000e+00 : f32
    %12 = vector.broadcast %cst_10 : f32 to vector<16x512xf32>
    %13 = arith.maximumf %11, %12 : vector<16x512xf32>
    %14 = arith.truncf %13 : vector<16x512xf32> to vector<16x512xbf16>
    %c0_11 = arith.constant 0 : index
    %c0_12 = arith.constant 0 : index
    %15 = vector.load %arg6[%c0_11, %c0_12] : memref<512x128xbf16, #tpu.memory_space<vmem>>, vector<512x128xbf16>
    %cst_13 = arith.constant dense<0.000000e+00> : vector<16x128xf32>
    %16 = tpu.matmul %14, %15, %cst_13 {dimension_numbers = #tpu.dot_dimension_numbers<[1], [0], [0], [1], [0, 0, 1, 1], [], []>} : vector<16x512xbf16>, vector<512x128xbf16>, vector<16x128xf32> -> vector<16x128xf32>
    %c0_14 = arith.constant 0 : index
    %c0_15 = arith.constant 0 : index
    %17 = vector.load %arg7[%c0_14, %c0_15] : memref<1x128xf32, #tpu.memory_space<vmem>>, vector<1x128xf32>
    %18 = vector.broadcast %17 : vector<1x128xf32> to vector<16x128xf32>
    %19 = arith.addf %16, %18 : vector<16x128xf32>
    %cst_16 = arith.constant 0.000000e+00 : f32
    %20 = vector.broadcast %cst_16 : f32 to vector<16x128xf32>
    %21 = arith.maximumf %19, %20 : vector<16x128xf32>
    %22 = arith.truncf %21 : vector<16x128xf32> to vector<16x128xbf16>
    %c0_17 = arith.constant 0 : index
    %c0_18 = arith.constant 0 : index
    %23 = vector.load %arg8[%c0_17, %c0_18] : memref<128x32xbf16, #tpu.memory_space<vmem>>, vector<128x32xbf16>
    %cst_19 = arith.constant dense<0.000000e+00> : vector<16x32xf32>
    %24 = tpu.matmul %22, %23, %cst_19 {dimension_numbers = #tpu.dot_dimension_numbers<[1], [0], [0], [1], [0, 0, 1, 1], [], []>} : vector<16x128xbf16>, vector<128x32xbf16>, vector<16x32xf32> -> vector<16x32xf32>
    %c0_20 = arith.constant 0 : index
    %c0_21 = arith.constant 0 : index
    %25 = vector.load %arg9[%c0_20, %c0_21] : memref<1x32xf32, #tpu.memory_space<vmem>>, vector<1x32xf32>
    %26 = vector.broadcast %25 : vector<1x32xf32> to vector<16x32xf32>
    %27 = arith.addf %24, %26 : vector<16x32xf32>
    %cst_22 = arith.constant 0.000000e+00 : f32
    %28 = vector.broadcast %cst_22 : f32 to vector<16x32xf32>
    %29 = arith.maximumf %27, %28 : vector<16x32xf32>
    %c0_23 = arith.constant 0 : index
    %c0_24 = arith.constant 0 : index
    %30 = vector.load %arg10[%c0_23, %c0_24] : memref<1x32xf32, #tpu.memory_space<vmem>>, vector<1x32xf32>
    %31 = vector.broadcast %30 : vector<1x32xf32> to vector<16x32xf32>
    %32 = arith.mulf %29, %31 : vector<16x32xf32>
    %cst_25 = arith.constant dense<0.000000e+00> : vector<16xf32>
    %33 = vector.multi_reduction <add>, %32, %cst_25 [1] : vector<16x32xf32> to vector<16xf32>
    %34 = vector.shape_cast %33 : vector<16xf32> to vector<16x1xf32>
    %c0_26 = arith.constant 0 : index
    %c0_27 = arith.constant 0 : index
    %35 = vector.load %arg11[%c0_26, %c0_27] : memref<1x1xf32, #tpu.memory_space<vmem>>, vector<1x1xf32>
    %36 = vector.broadcast %35 : vector<1x1xf32> to vector<16x1xf32>
    %37 = arith.addf %34, %36 : vector<16x1xf32>
    %c0_28 = arith.constant 0 : index
    %c0_29 = arith.constant 0 : index
    %38 = vector.load %arg12[%c0_28, %c0_29] : memref<16x1xf32, #tpu.memory_space<vmem>>, vector<16x1xf32>
    tpu.vector_store %arg12[%c0_28, %c0_29], %37 {strides = array<i32>} : memref<16x1xf32, #tpu.memory_space<vmem>>, vector<16x1xf32>,
    return
  }
  func.func @transform_0(%arg0: i32) -> (i32, i32) {
    %c0_i32 = arith.constant 0 : i32
    %c0_i32_0 = arith.constant 0 : i32
    return %arg0, %c0_i32 : i32, i32
  }
  func.func @transform_1(%arg0: i32) -> (i32, i32) {
    %c0_i32 = arith.constant 0 : i32
    %c0_i32_0 = arith.constant 0 : i32
    return %arg0, %c0_i32 : i32, i32
  }
  func.func @transform_2(%arg0: i32) -> (i32, i32) {
    %c0_i32 = arith.constant 0 : i32
    %c0_i32_0 = arith.constant 0 : i32
    %c0_i32_1 = arith.constant 0 : i32
    return %c0_i32, %c0_i32_0 : i32, i32
  }
  func.func @transform_3(%arg0: i32) -> (i32, i32) {
    %c0_i32 = arith.constant 0 : i32
    %c0_i32_0 = arith.constant 0 : i32
    %c0_i32_1 = arith.constant 0 : i32
    return %c0_i32, %c0_i32_0 : i32, i32
  }
  func.func @transform_4(%arg0: i32) -> (i32, i32) {
    %c0_i32 = arith.constant 0 : i32
    %c0_i32_0 = arith.constant 0 : i32
    %c0_i32_1 = arith.constant 0 : i32
    return %c0_i32, %c0_i32_0 : i32, i32
  }
  func.func @transform_5(%arg0: i32) -> (i32, i32) {
    %c0_i32 = arith.constant 0 : i32
    %c0_i32_0 = arith.constant 0 : i32
    %c0_i32_1 = arith.constant 0 : i32
    return %c0_i32, %c0_i32_0 : i32, i32
  }
  func.func @transform_6(%arg0: i32) -> (i32, i32) {
    %c0_i32 = arith.constant 0 : i32
    %c0_i32_0 = arith.constant 0 : i32
    %c0_i32_1 = arith.constant 0 : i32
    return %c0_i32, %c0_i32_0 : i32, i32
  }
  func.func @transform_7(%arg0: i32) -> (i32, i32) {
    %c0_i32 = arith.constant 0 : i32
    %c0_i32_0 = arith.constant 0 : i32
    %c0_i32_1 = arith.constant 0 : i32
    return %c0_i32, %c0_i32_0 : i32, i32
  }
  func.func @transform_8(%arg0: i32) -> (i32, i32) {
    %c0_i32 = arith.constant 0 : i32
    %c0_i32_0 = arith.constant 0 : i32
    %c0_i32_1 = arith.constant 0 : i32
    return %c0_i32, %c0_i32_0 : i32, i32
  }
  func.func @transform_9(%arg0: i32) -> (i32, i32) {
    %c0_i32 = arith.constant 0 : i32
    %c0_i32_0 = arith.constant 0 : i32
    %c0_i32_1 = arith.constant 0 : i32
    return %c0_i32, %c0_i32_0 : i32, i32
  }
  func.func @transform_10(%arg0: i32) -> (i32, i32) {
    %c0_i32 = arith.constant 0 : i32
    %c0_i32_0 = arith.constant 0 : i32
    %c0_i32_1 = arith.constant 0 : i32
    return %c0_i32, %c0_i32_0 : i32, i32
  }
  func.func @transform_11(%arg0: i32) -> (i32, i32) {
    %c0_i32 = arith.constant 0 : i32
    %c0_i32_0 = arith.constant 0 : i32
    return %arg0, %c0_i32 : i32, i32
  }
}

</mosaic_0001>

<llo_original>
// kernel: tpu_custom_call.1
$region0: #{tpu_custom_call.1}
  #allocation0 [shape = 'u32[]', space=smem, size = 0x4, offset = 0x4, fixed_abs, tag = 'smem constant byte address 0x4 - core index']
  #allocation1 [shape = 'u32[144,128]{1,0:T(1,128)}', space=vmem, size = 0x12000, scoped, tag = 'internal scratch']
  #allocation2 [shape = 'f32[1,1]{1,0:T(1,128)S(1)}', space=vmem, size = 0x200, scoped, tag = 'scoped memory for tpu_custom_call.1']
  %s0 = inlined_call_operand.hbm [shape: f32[16,18], index: 0, kind: input, shape index: {}]
  %s1 = inlined_call_operand.hbm [shape: f32[16,15], index: 1, kind: input, shape index: {}]
  %s2 = inlined_call_operand.vmem [shape: bf16[18,512], index: 2, kind: input, shape index: {}]
  %s3 = inlined_call_operand.vmem [shape: bf16[15,512], index: 3, kind: input, shape index: {}]
  %s4 = inlined_call_operand.vmem [shape: f32[1,512], index: 4, kind: input, shape index: {}]
  %s5 = inlined_call_operand.hbm [shape: bf16[512,128], index: 5, kind: input, shape index: {}]
  %s6 = inlined_call_operand.vmem [shape: f32[1,128], index: 6, kind: input, shape index: {}]
  %s7 = inlined_call_operand.vmem [shape: bf16[128,32], index: 7, kind: input, shape index: {}]
  %s8 = inlined_call_operand.vmem [shape: f32[1,32], index: 8, kind: input, shape index: {}]
  %s9 = inlined_call_operand.vmem [shape: f32[1,32], index: 9, kind: input, shape index: {}]
  %s10 = inlined_call_operand.<no memory space> [shape: f32[1,1], index: 10, kind: input, shape index: {}]
  %s11 = inlined_call_operand.vmem [shape: f32[16,1], index: 11, kind: output, shape index: {}]
  %s12 = sld [smem:[#allocation0]]
  $region66: #{tpu_custom_call.1} parent=0
    _
  %s14 = ssub.s32 1, %s12
  %s15 = scalar_select 0, %s14, %s12
  %v16 = vstv %s10
  %17 = vst [vmem:[#allocation2] sm:$0x1] %v16
  $region1: #{tpu_custom_call.1} parent=0
    #allocation3 [shape = 'u8[8192]{0}', space=vmem, size = 0x2000, scoped, tag = 'input window, operand 0, single buffered']
    #allocation4 [shape = 's32[1]{0}', space=sflag, size = 0x4, scoped, tag = 'scoped memory for tpu_custom_call.1']
    #allocation5 [shape = 'u8[8192]{0}', space=vmem, size = 0x2000, scoped, tag = 'input window, operand 1, single buffered']
    #allocation6 [shape = 's32[1]{0}', space=sflag, size = 0x4, scoped, tag = 'scoped memory for tpu_custom_call.1']
    #allocation7 [shape = 'u8[131072]{0}', space=vmem, size = 0x20000, scoped, tag = 'input window, operand 5, single buffered']
    %18 = vsyncpa [#allocation4], 0
    %19 = vsyncpa [#allocation6], 0
    // Predicated region
    $region2: #{tpu_custom_call.1} parent=1 // pred_check
      _
    $region3: #{tpu_custom_call.1} parent=1 // pred_check_branch
      %21 = sbr.rel (0) target = $region5
    $region4: #{tpu_custom_call.1} parent=1 // pred_region
      %s23 = ssub.s32 256, 256
      %24 = vsyncadd [#allocation4], %s23
      %s25 = sshll.u32 [#allocation3], 4
      %s26 = int_to_ptr.vmem [resolvable:$true] %s25
      %31 = dma.hbm_to_vmem [thread:$0]  %s0, 256, %s26, [#allocation4], 128, 128, 8
    $region5: #{tpu_custom_call.1} parent=1 // pred_fallthru
      _
    // Predicated region
    $region6: #{tpu_custom_call.1} parent=1 // pred_check
      _
    $region7: #{tpu_custom_call.1} parent=1 // pred_check_branch
      %33 = sbr.rel (0) target = $region9
    $region8: #{tpu_custom_call.1} parent=1 // pred_region
      %s35 = ssub.s32 256, 256
      %36 = vsyncadd [#allocation6], %s35
      %s37 = sshll.u32 [#allocation5], 4
      %s38 = int_to_ptr.vmem [resolvable:$true] %s37
      %43 = dma.hbm_to_vmem [thread:$0]  %s1, 256, %s38, [#allocation6], 128, 128, 8
    $region9: #{tpu_custom_call.1} parent=1 // pred_fallthru
      _
    // Predicated region
    $region10: #{tpu_custom_call.1} parent=1 // pred_check
      _
    $region11: #{tpu_custom_call.1} parent=1 // pred_check_branch
      %45 = sbr.rel (0) target = $region13
    $region12: #{tpu_custom_call.1} parent=1 // pred_region
      _
    $region13: #{tpu_custom_call.1} parent=1 // pred_fallthru
      _
    // Predicated region
    $region14: #{tpu_custom_call.1} parent=1 // pred_check
      _
    $region15: #{tpu_custom_call.1} parent=1 // pred_check_branch
      %47 = sbr.rel (0) target = $region17
    $region16: #{tpu_custom_call.1} parent=1 // pred_region
      _
    $region17: #{tpu_custom_call.1} parent=1 // pred_fallthru
      _
    // Predicated region
    $region18: #{tpu_custom_call.1} parent=1 // pred_check
      _
    $region19: #{tpu_custom_call.1} parent=1 // pred_check_branch
      %49 = sbr.rel (0) target = $region21
    $region20: #{tpu_custom_call.1} parent=1 // pred_region
      _
    $region21: #{tpu_custom_call.1} parent=1 // pred_fallthru
      _
    // Predicated region
    $region22: #{tpu_custom_call.1} parent=1 // pred_check
      _
    $region23: #{tpu_custom_call.1} parent=1 // pred_check_branch
      %51 = sbr.rel (0) target = $region25
    $region24: #{tpu_custom_call.1} parent=1 // pred_region
      %s53 = ssub.s32 4096, 4096
      %54 = vsyncadd [#allocation6], %s53
      %s55 = sshll.u32 [#allocation7], 4
      %s56 = int_to_ptr.vmem [resolvable:$true] %s55
      %61 = dma.hbm_to_vmem [thread:$0]  %s5, 4096, %s56, [#allocation6], 64, 64, 4
    $region25: #{tpu_custom_call.1} parent=1 // pred_fallthru
      _
    // Predicated region
    $region26: #{tpu_custom_call.1} parent=1 // pred_check
      _
    $region27: #{tpu_custom_call.1} parent=1 // pred_check_branch
      %63 = sbr.rel (0) target = $region29
    $region28: #{tpu_custom_call.1} parent=1 // pred_region
      _
    $region29: #{tpu_custom_call.1} parent=1 // pred_fallthru
      _
    // Predicated region
    $region30: #{tpu_custom_call.1} parent=1 // pred_check
      _
    $region31: #{tpu_custom_call.1} parent=1 // pred_check_branch
      %65 = sbr.rel (0) target = $region33
    $region32: #{tpu_custom_call.1} parent=1 // pred_region
      _
    $region33: #{tpu_custom_call.1} parent=1 // pred_fallthru
      _
    // Predicated region
    $region34: #{tpu_custom_call.1} parent=1 // pred_check
      _
    $region35: #{tpu_custom_call.1} parent=1 // pred_check_branch
      %67 = sbr.rel (0) target = $region37
    $region36: #{tpu_custom_call.1} parent=1 // pred_region
      _
    $region37: #{tpu_custom_call.1} parent=1 // pred_fallthru
      _
    // Predicated region
    $region38: #{tpu_custom_call.1} parent=1 // pred_check
      _
    $region39: #{tpu_custom_call.1} parent=1 // pred_check_branch
      %69 = sbr.rel (0) target = $region41
    $region40: #{tpu_custom_call.1} parent=1 // pred_region
      _
    $region41: #{tpu_custom_call.1} parent=1 // pred_fallthru
      _
    // Predicated region
    $region42: #{tpu_custom_call.1} parent=1 // pred_check
      _
    $region43: #{tpu_custom_call.1} parent=1 // pred_check_branch
      %71 = sbr.rel (0) target = $region45
    $region44: #{tpu_custom_call.1} parent=1 // pred_region
      _
    $region45: #{tpu_custom_call.1} parent=1 // pred_fallthru
      _
    // Predicated region
    $region46: #{tpu_custom_call.1} parent=1 // pred_check
      _
    $region47: #{tpu_custom_call.1} parent=1 // pred_check_branch
      %73 = sbr.rel (0) target = $region49
    $region48: #{tpu_custom_call.1} parent=1 // pred_region
      %74 = dma.done [#allocation4], 256
    $region49: #{tpu_custom_call.1} parent=1 // pred_fallthru
      _
    // Predicated region
    $region50: #{tpu_custom_call.1} parent=1 // pred_check
      _
    $region51: #{tpu_custom_call.1} parent=1 // pred_check_branch
      %76 = sbr.rel (0) target = $region53
    $region52: #{tpu_custom_call.1} parent=1 // pred_region
      %77 = dma.done [#allocation6], 256
    $region53: #{tpu_custom_call.1} parent=1 // pred_fallthru
      _
    // Predicated region
    $region54: #{tpu_custom_call.1} parent=1 // pred_check
      _
    $region55: #{tpu_custom_call.1} parent=1 // pred_check_branch
      %79 = sbr.rel (0) target = $region57
    $region56: #{tpu_custom_call.1} parent=1 // pred_region
      %80 = dma.done [#allocation6], 4096
    $region57: #{tpu_custom_call.1} parent=1 // pred_fallthru
      _
    %v82 = vld [vmem:[#allocation3] sm:$0xff]
    %v83 = vld [vmem:[#allocation3 + $0x8] sm:$0xff]
    %v84 = vpack.c.bf16 %v83, %v82
    %v85 = vld [vmem:[#allocation5] sm:$0xff]
    %v86 = vld [vmem:[#allocation5 + $0x8] sm:$0xff]
    %v87 = vpack.c.bf16 %v86, %v85
    %v88 = vld [vmem:[%s2] sm:$0xff]
    %v89 = vld [vmem:[%s2 + $0x8] sm:$0xff]
    %v90 = vld [vmem:[%s2 + $0x10] sm:$0xff]
    %v91 = vld [vmem:[%s2 + $0x18] sm:$0xff]
    %v92 = vld [vmem:[%s2 + $0x20] sm:$0x11]
    %v93 = vld [vmem:[%s2 + $0x28] sm:$0x11]
    %v94 = vld [vmem:[%s3] sm:$0xff]
    %v95 = vld [vmem:[%s3 + $0x8] sm:$0xff]
    %v96 = vld [vmem:[%s3 + $0x10] sm:$0xff]
    %v97 = vld [vmem:[%s3 + $0x18] sm:$0xff]
    %v102 = vunpack.c.l.b16 %v94
    %v103 = vunpack.c.h.b16 %v94
    %v104 = vunpack.c.l.b16 %v95
    %v105 = vunpack.c.h.b16 %v95
    %v106 = vunpack.c.l.b16 %v96
    %v107 = vunpack.c.h.b16 %v96
    %v108 = vunpack.c.l.b16 %v97
    %v109 = vunpack.c.h.b16 %v97
    %v110 = vpack.c.b16 %v106, %v102
    %v111 = vpack.c.b16 %v107, %v103
    %v112 = vpack.c.b16 %v108, %v104
    %v113 = vpack.c.b16 %v109, %v105
    %vm114 = vcmask 121856
    %v116 = vsel %vm114, %v87, 0
    %vm118 = vcmask 1046528
    %vm119 = vcmask 1047552
    %v120 = vsel %vm118, 4294967295, 65535
    %v121 = vsel %vm119, %v120, 0
    %v123 = vand.u32 %v110, %v121
    %v126 = vand.u32 %v111, %v121
    %v129 = vand.u32 %v112, %v121
    %v132 = vand.u32 %v113, %v121
    %134 = vmatprep.subr.bf16.mxu0 %v126
    %135 = vmatpush1.bf16.msra.mxu0 %v123
    %136 = vmatprep.subr.bf16.mxu0 0
    %137 = vmatpush1.bf16.msra.mxu0 0
    %138 = vmatprep.subr.bf16.mxu0 0
    %139 = vmatpush1.bf16.msra.mxu0 0
    %140 = vmatprep.subr.bf16.mxu0 0
    %141 = vmatpush1.bf16.msra.mxu0 0
    %142 = vmatprep.subr.bf16.mxu0 0
    %143 = vmatpush1.bf16.msra.mxu0 0
    %144 = vmatprep.subr.bf16.mxu0 0
    %145 = vmatpush1.bf16.msra.mxu0 0
    %146 = vmatprep.subr.bf16.mxu0 0
    %147 = vmatpush1.bf16.msra.mxu0 0
    %148 = vmatprep.subr.bf16.mxu0 0
    %149 = vmatpush1.bf16.msra.mxu0 0
    %150 = vmatprep.subr.bf16.mxu0 0
    %151 = vmatpush1.bf16.msra.mxu0 0
    %152 = vmatprep.subr.bf16.mxu0 0
    %153 = vmatpush1.bf16.msra.mxu0 0
    %154 = vmatprep.subr.bf16.mxu0 0
    %155 = vmatpush1.bf16.msra.mxu0 0
    %156 = vmatprep.subr.bf16.mxu0 0
    %157 = vmatpush1.bf16.msra.mxu0 0
    %158 = vmatprep.subr.bf16.mxu0 0
    %159 = vmatpush1.bf16.msra.mxu0 0
    %160 = vmatprep.subr.bf16.mxu0 0
    %161 = vmatpush1.bf16.msra.mxu0 0
    %162 = vmatprep.subr.bf16.mxu0 0
    %163 = vmatpush1.bf16.msra.mxu0 0
    %164 = vmatprep.subr.bf16.mxu0 0
    %165 = vmatpush1.bf16.msra.mxu0 0
    %166 = vmatprep.mubr.bf16.mxu0 0
    %167 = vmatmul.mubr.bf16.gmra.mrb[0].mxu0 %v116
    %v168 = vpop.f32.mrb[0].mxu0
    %v169 = vadd.f32 0.0, %v168
    %v170 = vpop.f32.mrb[0].mxu0
    %v171 = vadd.f32 0.0, %v170
    %v172 = vpop.f32.mrb[0].mxu0
    %v173 = vadd.f32 0.0, %v172
    %v174 = vpop.f32.mrb[0].mxu0
    %v175 = vadd.f32 0.0, %v174
    %176 = vdwg.mxu0
    %177 = vmatprep.subr.bf16.mxu0 %v132
    %178 = vmatpush1.bf16.msra.mxu0 %v129
    %179 = vmatprep.subr.bf16.mxu0 0
    %180 = vmatpush1.bf16.msra.mxu0 0
    %181 = vmatprep.subr.bf16.mxu0 0
    %182 = vmatpush1.bf16.msra.mxu0 0
    %183 = vmatprep.subr.bf16.mxu0 0
    %184 = vmatpush1.bf16.msra.mxu0 0
    %185 = vmatprep.subr.bf16.mxu0 0
    %186 = vmatpush1.bf16.msra.mxu0 0
    %187 = vmatprep.subr.bf16.mxu0 0
    %188 = vmatpush1.bf16.msra.mxu0 0
    %189 = vmatprep.subr.bf16.mxu0 0
    %190 = vmatpush1.bf16.msra.mxu0 0
    %191 = vmatprep.subr.bf16.mxu0 0
    %192 = vmatpush1.bf16.msra.mxu0 0
    %193 = vmatprep.subr.bf16.mxu0 0
    %194 = vmatpush1.bf16.msra.mxu0 0
    %195 = vmatprep.subr.bf16.mxu0 0
    %196 = vmatpush1.bf16.msra.mxu0 0
    %197 = vmatprep.subr.bf16.mxu0 0
    %198 = vmatpush1.bf16.msra.mxu0 0
    %199 = vmatprep.subr.bf16.mxu0 0
    %200 = vmatpush1.bf16.msra.mxu0 0
    %201 = vmatprep.subr.bf16.mxu0 0
    %202 = vmatpush1.bf16.msra.mxu0 0
    %203 = vmatprep.subr.bf16.mxu0 0
    %204 = vmatpush1.bf16.msra.mxu0 0
    %205 = vmatprep.subr.bf16.mxu0 0
    %206 = vmatpush1.bf16.msra.mxu0 0
    %207 = vmatprep.subr.bf16.mxu0 0
    %208 = vmatpush1.bf16.msra.mxu0 0
    %209 = vmatprep.mubr.bf16.mxu0 0
    %210 = vmatmul.mubr.bf16.gmra.mrb[0].mxu0 %v116
    %v211 = vpop.f32.mrb[0].mxu0
    %v212 = vadd.f32 0.0, %v211
    %v213 = vpop.f32.mrb[0].mxu0
    %v214 = vadd.f32 0.0, %v213
    %v215 = vpop.f32.mrb[0].mxu0
    %v216 = vadd.f32 0.0, %v215
    %v217 = vpop.f32.mrb[0].mxu0
    %v218 = vadd.f32 0.0, %v217
    %219 = vdwg.mxu0
    %v226 = vunpack.c.l.b16 %v88
    %v227 = vunpack.c.h.b16 %v88
    %v228 = vunpack.c.l.b16 %v89
    %v229 = vunpack.c.h.b16 %v89
    %v230 = vunpack.c.l.b16 %v90
    %v231 = vunpack.c.h.b16 %v90
    %v232 = vunpack.c.l.b16 %v91
    %v233 = vunpack.c.h.b16 %v91
    %v234 = vunpack.c.l.b16 %v92
    %v235 = vunpack.c.h.b16 %v92
    %v236 = vunpack.c.l.b16 %v93
    %v237 = vunpack.c.h.b16 %v93
    %v238 = vpack.c.b16 %v230, %v226
    %v239 = vpack.c.b16 %v231, %v227
    %v240 = vpack.c.b16 %v232, %v228
    %v241 = vpack.c.b16 %v233, %v229
    %v242 = vpack.c.b16 %v234, %v234
    %v243 = vpack.c.b16 %v235, %v235
    %v244 = vpack.c.b16 %v236, %v236
    %v245 = vpack.c.b16 %v237, %v237
    %vm250 = vcmask 146432
    %v252 = vsel %vm250, %v84, 0
    %vm254 = vcmask 1040384
    %v256 = vsel %vm254, %v242, 0
    %v259 = vsel %vm254, %v243, 0
    %v262 = vsel %vm254, %v244, 0
    %v265 = vsel %vm254, %v245, 0
    %267 = vmatprep.subr.bf16.mxu0 %v239
    %268 = vmatpush1.bf16.msra.mxu0 %v238
    %269 = vmatprep.subr.bf16.mxu0 %v259
    %270 = vmatpush1.bf16.msra.mxu0 %v256
    %271 = vmatprep.subr.bf16.mxu0 0
    %272 = vmatpush1.bf16.msra.mxu0 0
    %273 = vmatprep.subr.bf16.mxu0 0
    %274 = vmatpush1.bf16.msra.mxu0 0
    %275 = vmatprep.subr.bf16.mxu0 0
    %276 = vmatpush1.bf16.msra.mxu0 0
    %277 = vmatprep.subr.bf16.mxu0 0
    %278 = vmatpush1.bf16.msra.mxu0 0
    %279 = vmatprep.subr.bf16.mxu0 0
    %280 = vmatpush1.bf16.msra.mxu0 0
    %281 = vmatprep.subr.bf16.mxu0 0
    %282 = vmatpush1.bf16.msra.mxu0 0
    %283 = vmatprep.subr.bf16.mxu0 0
    %284 = vmatpush1.bf16.msra.mxu0 0
    %285 = vmatprep.subr.bf16.mxu0 0
    %286 = vmatpush1.bf16.msra.mxu0 0
    %287 = vmatprep.subr.bf16.mxu0 0
    %288 = vmatpush1.bf16.msra.mxu0 0
    %289 = vmatprep.subr.bf16.mxu0 0
    %290 = vmatpush1.bf16.msra.mxu0 0
    %291 = vmatprep.subr.bf16.mxu0 0
    %292 = vmatpush1.bf16.msra.mxu0 0
    %293 = vmatprep.subr.bf16.mxu0 0
    %294 = vmatpush1.bf16.msra.mxu0 0
    %295 = vmatprep.subr.bf16.mxu0 0
    %296 = vmatpush1.bf16.msra.mxu0 0
    %297 = vmatprep.subr.bf16.mxu0 0
    %298 = vmatpush1.bf16.msra.mxu0 0
    %299 = vmatprep.mubr.bf16.mxu0 0
    %300 = vmatmul.mubr.bf16.gmra.mrb[0].mxu0 %v252
    %v301 = vpop.f32.mrb[0].mxu0
    %v302 = vadd.f32 %v169, %v301
    %v303 = vpop.f32.mrb[0].mxu0
    %v304 = vadd.f32 %v171, %v303
    %v305 = vpop.f32.mrb[0].mxu0
    %v306 = vadd.f32 %v173, %v305
    %v307 = vpop.f32.mrb[0].mxu0
    %v308 = vadd.f32 %v175, %v307
    %309 = vdwg.mxu0
    %310 = vmatprep.subr.bf16.mxu0 %v241
    %311 = vmatpush1.bf16.msra.mxu0 %v240
    %312 = vmatprep.subr.bf16.mxu0 %v265
    %313 = vmatpush1.bf16.msra.mxu0 %v262
    %314 = vmatprep.subr.bf16.mxu0 0
    %315 = vmatpush1.bf16.msra.mxu0 0
    %316 = vmatprep.subr.bf16.mxu0 0
    %317 = vmatpush1.bf16.msra.mxu0 0
    %318 = vmatprep.subr.bf16.mxu0 0
    %319 = vmatpush1.bf16.msra.mxu0 0
    %320 = vmatprep.subr.bf16.mxu0 0
    %321 = vmatpush1.bf16.msra.mxu0 0
    %322 = vmatprep.subr.bf16.mxu0 0
    %323 = vmatpush1.bf16.msra.mxu0 0
    %324 = vmatprep.subr.bf16.mxu0 0
    %325 = vmatpush1.bf16.msra.mxu0 0
    %326 = vmatprep.subr.bf16.mxu0 0
    %327 = vmatpush1.bf16.msra.mxu0 0
    %328 = vmatprep.subr.bf16.mxu0 0
    %329 = vmatpush1.bf16.msra.mxu0 0
    %330 = vmatprep.subr.bf16.mxu0 0
    %331 = vmatpush1.bf16.msra.mxu0 0
    %332 = vmatprep.subr.bf16.mxu0 0
    %333 = vmatpush1.bf16.msra.mxu0 0
    %334 = vmatprep.subr.bf16.mxu0 0
    %335 = vmatpush1.bf16.msra.mxu0 0
    %336 = vmatprep.subr.bf16.mxu0 0
    %337 = vmatpush1.bf16.msra.mxu0 0
    %338 = vmatprep.subr.bf16.mxu0 0
    %339 = vmatpush1.bf16.msra.mxu0 0
    %340 = vmatprep.subr.bf16.mxu0 0
    %341 = vmatpush1.bf16.msra.mxu0 0
    %342 = vmatprep.mubr.bf16.mxu0 0
    %343 = vmatmul.mubr.bf16.gmra.mrb[0].mxu0 %v252
    %v344 = vpop.f32.mrb[0].mxu0
    %v345 = vadd.f32 %v212, %v344
    %v346 = vpop.f32.mrb[0].mxu0
    %v347 = vadd.f32 %v214, %v346
    %v348 = vpop.f32.mrb[0].mxu0
    %v349 = vadd.f32 %v216, %v348
    %v350 = vpop.f32.mrb[0].mxu0
    %v351 = vadd.f32 %v218, %v350
    %352 = vdwg.mxu0
    %v353 = vld [vmem:[%s4] sm:$0xf]
    %v355 = vlaneseq
    %v356 = vshrl.u32 %v355, 7
    %v357 = vsub.s32 0, %v356
    %v358 = vrot.slane %v353, %v357
    %v359 = vlaneseq
    %v360 = vshrl.u32 %v359, 7
    %v361 = vsub.s32 1, %v360
    %v362 = vrot.slane %v353, %v361
    %v363 = vlaneseq
    %v364 = vshrl.u32 %v363, 7
    %v365 = vsub.s32 2, %v364
    %v366 = vrot.slane %v353, %v365
    %v367 = vlaneseq
    %v368 = vshrl.u32 %v367, 7
    %v369 = vsub.s32 3, %v368
    %v370 = vrot.slane %v353, %v369
    %v375 = vadd.f32 %v302, %v358
    %v376 = vadd.f32 %v304, %v362
    %v377 = vadd.f32 %v345, %v366
    %v378 = vadd.f32 %v347, %v370
    %v379 = vadd.f32 %v306, %v358
    %v380 = vadd.f32 %v308, %v362
    %v381 = vadd.f32 %v349, %v366
    %v382 = vadd.f32 %v351, %v370
    %v383 = vmax.f32 %v375, 0.0
    %v384 = vmax.f32 %v376, 0.0
    %v385 = vmax.f32 %v377, 0.0
    %v386 = vmax.f32 %v378, 0.0
    %v387 = vmax.f32 %v379, 0.0
    %v388 = vmax.f32 %v380, 0.0
    %v389 = vmax.f32 %v381, 0.0
    %v390 = vmax.f32 %v382, 0.0
    %v391 = vpack.c.bf16 %v387, %v383
    %v392 = vpack.c.bf16 %v388, %v384
    %v393 = vpack.c.bf16 %v389, %v385
    %v394 = vpack.c.bf16 %v390, %v386
    %v395 = vld [vmem:[#allocation7] sm:$0xf]
    %v396 = vld [vmem:[#allocation7 + $0x4] sm:$0xf]
    %v397 = vld [vmem:[#allocation7 + $0x8] sm:$0xf]
    %v398 = vld [vmem:[#allocation7 + $0xc] sm:$0xf]
    %v399 = vld [vmem:[#allocation7 + $0x10] sm:$0xf]
    %v400 = vld [vmem:[#allocation7 + $0x14] sm:$0xf]
    %v401 = vld [vmem:[#allocation7 + $0x18] sm:$0xf]
    %v402 = vld [vmem:[#allocation7 + $0x1c] sm:$0xf]
    %v403 = vld [vmem:[#allocation7 + $0x20] sm:$0xf]
    %v404 = vld [vmem:[#allocation7 + $0x24] sm:$0xf]
    %v405 = vld [vmem:[#allocation7 + $0x28] sm:$0xf]
    %v406 = vld [vmem:[#allocation7 + $0x2c] sm:$0xf]
    %v407 = vld [vmem:[#allocation7 + $0x30] sm:$0xf]
    %v408 = vld [vmem:[#allocation7 + $0x34] sm:$0xf]
    %v409 = vld [vmem:[#allocation7 + $0x38] sm:$0xf]
    %v410 = vld [vmem:[#allocation7 + $0x3c] sm:$0xf]
    %v411 = vld [vmem:[#allocation7 + $0x40] sm:$0xf]
    %v412 = vld [vmem:[#allocation7 + $0x44] sm:$0xf]
    %v413 = vld [vmem:[#allocation7 + $0x48] sm:$0xf]
    %v414 = vld [vmem:[#allocation7 + $0x4c] sm:$0xf]
    %v415 = vld [vmem:[#allocation7 + $0x50] sm:$0xf]
    %v416 = vld [vmem:[#allocation7 + $0x54] sm:$0xf]
    %v417 = vld [vmem:[#allocation7 + $0x58] sm:$0xf]
    %v418 = vld [vmem:[#allocation7 + $0x5c] sm:$0xf]
    %v419 = vld [vmem:[#allocation7 + $0x60] sm:$0xf]
    %v420 = vld [vmem:[#allocation7 + $0x64] sm:$0xf]
    %v421 = vld [vmem:[#allocation7 + $0x68] sm:$0xf]
    %v422 = vld [vmem:[#allocation7 + $0x6c] sm:$0xf]
    %v423 = vld [vmem:[#allocation7 + $0x70] sm:$0xf]
    %v424 = vld [vmem:[#allocation7 + $0x74] sm:$0xf]
    %v425 = vld [vmem:[#allocation7 + $0x78] sm:$0xf]
    %v426 = vld [vmem:[#allocation7 + $0x7c] sm:$0xf]
    %v427 = vld [vmem:[#allocation7 + $0x80] sm:$0xf]
    %v428 = vld [vmem:[#allocation7 + $0x84] sm:$0xf]
    %v429 = vld [vmem:[#allocation7 + $0x88] sm:$0xf]
    %v430 = vld [vmem:[#allocation7 + $0x8c] sm:$0xf]
    %v431 = vld [vmem:[#allocation7 + $0x90] sm:$0xf]
    %v432 = vld [vmem:[#allocation7 + $0x94] sm:$0xf]
    %v433 = vld [vmem:[#allocation7 + $0x98] sm:$0xf]
    %v434 = vld [vmem:[#allocation7 + $0x9c] sm:$0xf]
    %v435 = vld [vmem:[#allocation7 + $0xa0] sm:$0xf]
    %v436 = vld [vmem:[#allocation7 + $0xa4] sm:$0xf]
    %v437 = vld [vmem:[#allocation7 + $0xa8] sm:$0xf]
    %v438 = vld [vmem:[#allocation7 + $0xac] sm:$0xf]
    %v439 = vld [vmem:[#allocation7 + $0xb0] sm:$0xf]
    %v440 = vld [vmem:[#allocation7 + $0xb4] sm:$0xf]
    %v441 = vld [vmem:[#allocation7 + $0xb8] sm:$0xf]
    %v442 = vld [vmem:[#allocation7 + $0xbc] sm:$0xf]
    %v443 = vld [vmem:[#allocation7 + $0xc0] sm:$0xf]
    %v444 = vld [vmem:[#allocation7 + $0xc4] sm:$0xf]
    %v445 = vld [vmem:[#allocation7 + $0xc8] sm:$0xf]
    %v446 = vld [vmem:[#allocation7 + $0xcc] sm:$0xf]
    %v447 = vld [vmem:[#allocation7 + $0xd0] sm:$0xf]
    %v448 = vld [vmem:[#allocation7 + $0xd4] sm:$0xf]
    %v449 = vld [vmem:[#allocation7 + $0xd8] sm:$0xf]
    %v450 = vld [vmem:[#allocation7 + $0xdc] sm:$0xf]
    %v451 = vld [vmem:[#allocation7 + $0xe0] sm:$0xf]
    %v452 = vld [vmem:[#allocation7 + $0xe4] sm:$0xf]
    %v453 = vld [vmem:[#allocation7 + $0xe8] sm:$0xf]
    %v454 = vld [vmem:[#allocation7 + $0xec] sm:$0xf]
    %v455 = vld [vmem:[#allocation7 + $0xf0] sm:$0xf]
    %v456 = vld [vmem:[#allocation7 + $0xf4] sm:$0xf]
    %v457 = vld [vmem:[#allocation7 + $0xf8] sm:$0xf]
    %v458 = vld [vmem:[#allocation7 + $0xfc] sm:$0xf]
    %v459 = vld [vmem:[%s6] sm:$0x1]
    %v461 = vlaneseq
    %v462 = vshrl.u32 %v461, 7
    %v463 = vsub.s32 0, %v462
    %v464 = vrot.slane %v459, %v463
    %v530 = vunpack.c.l.b16 %v395
    %v531 = vunpack.c.l.b16 %v396
    %v532 = vunpack.c.l.b16 %v397
    %v533 = vunpack.c.l.b16 %v398
    %v534 = vunpack.c.l.b16 %v399
    %v535 = vunpack.c.l.b16 %v400
    %v536 = vunpack.c.l.b16 %v401
    %v537 = vunpack.c.l.b16 %v402
    %v538 = vunpack.c.l.b16 %v403
    %v539 = vunpack.c.l.b16 %v404
    %v540 = vunpack.c.l.b16 %v405
    %v541 = vunpack.c.l.b16 %v406
    %v542 = vunpack.c.l.b16 %v407
    %v543 = vunpack.c.l.b16 %v408
    %v544 = vunpack.c.l.b16 %v409
    %v545 = vunpack.c.l.b16 %v410
    %v546 = vunpack.c.l.b16 %v411
    %v547 = vunpack.c.l.b16 %v412
    %v548 = vunpack.c.l.b16 %v413
    %v549 = vunpack.c.l.b16 %v414
    %v550 = vunpack.c.l.b16 %v415
    %v551 = vunpack.c.l.b16 %v416
    %v552 = vunpack.c.l.b16 %v417
    %v553 = vunpack.c.l.b16 %v418
    %v554 = vunpack.c.l.b16 %v419
    %v555 = vunpack.c.l.b16 %v420
    %v556 = vunpack.c.l.b16 %v421
    %v557 = vunpack.c.l.b16 %v422
    %v558 = vunpack.c.l.b16 %v423
    %v559 = vunpack.c.l.b16 %v424
    %v560 = vunpack.c.l.b16 %v425
    %v561 = vunpack.c.l.b16 %v426
    %v562 = vunpack.c.l.b16 %v427
    %v563 = vunpack.c.l.b16 %v428
    %v564 = vunpack.c.l.b16 %v429
    %v565 = vunpack.c.l.b16 %v430
    %v566 = vunpack.c.l.b16 %v431
    %v567 = vunpack.c.l.b16 %v432
    %v568 = vunpack.c.l.b16 %v433
    %v569 = vunpack.c.l.b16 %v434
    %v570 = vunpack.c.l.b16 %v435
    %v571 = vunpack.c.l.b16 %v436
    %v572 = vunpack.c.l.b16 %v437
    %v573 = vunpack.c.l.b16 %v438
    %v574 = vunpack.c.l.b16 %v439
    %v575 = vunpack.c.l.b16 %v440
    %v576 = vunpack.c.l.b16 %v441
    %v577 = vunpack.c.l.b16 %v442
    %v578 = vunpack.c.l.b16 %v443
    %v579 = vunpack.c.l.b16 %v444
    %v580 = vunpack.c.l.b16 %v445
    %v581 = vunpack.c.l.b16 %v446
    %v582 = vunpack.c.l.b16 %v447
    %v583 = vunpack.c.l.b16 %v448
    %v584 = vunpack.c.l.b16 %v449
    %v585 = vunpack.c.l.b16 %v450
    %v586 = vunpack.c.l.b16 %v451
    %v587 = vunpack.c.l.b16 %v452
    %v588 = vunpack.c.l.b16 %v453
    %v589 = vunpack.c.l.b16 %v454
    %v590 = vunpack.c.l.b16 %v455
    %v591 = vunpack.c.l.b16 %v456
    %v592 = vunpack.c.l.b16 %v457
    %v593 = vunpack.c.l.b16 %v458
    %v594 = vpack.c.b16 %v531, %v530
    %v595 = vpack.c.b16 %v533, %v532
    %v596 = vpack.c.b16 %v535, %v534
    %v597 = vpack.c.b16 %v537, %v536
    %v598 = vpack.c.b16 %v539, %v538
    %v599 = vpack.c.b16 %v541, %v540
    %v600 = vpack.c.b16 %v543, %v542
    %v601 = vpack.c.b16 %v545, %v544
    %v602 = vpack.c.b16 %v547, %v546
    %v603 = vpack.c.b16 %v549, %v548
    %v604 = vpack.c.b16 %v551, %v550
    %v605 = vpack.c.b16 %v553, %v552
    %v606 = vpack.c.b16 %v555, %v554
    %v607 = vpack.c.b16 %v557, %v556
    %v608 = vpack.c.b16 %v559, %v558
    %v609 = vpack.c.b16 %v561, %v560
    %v610 = vpack.c.b16 %v563, %v562
    %v611 = vpack.c.b16 %v565, %v564
    %v612 = vpack.c.b16 %v567, %v566
    %v613 = vpack.c.b16 %v569, %v568
    %v614 = vpack.c.b16 %v571, %v570
    %v615 = vpack.c.b16 %v573, %v572
    %v616 = vpack.c.b16 %v575, %v574
    %v617 = vpack.c.b16 %v577, %v576
    %v618 = vpack.c.b16 %v579, %v578
    %v619 = vpack.c.b16 %v581, %v580
    %v620 = vpack.c.b16 %v583, %v582
    %v621 = vpack.c.b16 %v585, %v584
    %v622 = vpack.c.b16 %v587, %v586
    %v623 = vpack.c.b16 %v589, %v588
    %v624 = vpack.c.b16 %v591, %v590
    %v625 = vpack.c.b16 %v593, %v592
    %658 = vmatprep.subr.bf16.mxu0 0
    %659 = vmatpush1.bf16.msra.mxu0 %v594
    %660 = vmatprep.subr.bf16.mxu0 0
    %661 = vmatpush1.bf16.msra.mxu0 %v595
    %662 = vmatprep.subr.bf16.mxu0 0
    %663 = vmatpush1.bf16.msra.mxu0 %v596
    %664 = vmatprep.subr.bf16.mxu0 0
    %665 = vmatpush1.bf16.msra.mxu0 %v597
    %666 = vmatprep.subr.bf16.mxu0 0
    %667 = vmatpush1.bf16.msra.mxu0 %v598
    %668 = vmatprep.subr.bf16.mxu0 0
    %669 = vmatpush1.bf16.msra.mxu0 %v599
    %670 = vmatprep.subr.bf16.mxu0 0
    %671 = vmatpush1.bf16.msra.mxu0 %v600
    %672 = vmatprep.subr.bf16.mxu0 0
    %673 = vmatpush1.bf16.msra.mxu0 %v601
    %674 = vmatprep.subr.bf16.mxu0 0
    %675 = vmatpush1.bf16.msra.mxu0 %v602
    %676 = vmatprep.subr.bf16.mxu0 0
    %677 = vmatpush1.bf16.msra.mxu0 %v603
    %678 = vmatprep.subr.bf16.mxu0 0
    %679 = vmatpush1.bf16.msra.mxu0 %v604
    %680 = vmatprep.subr.bf16.mxu0 0
    %681 = vmatpush1.bf16.msra.mxu0 %v605
    %682 = vmatprep.subr.bf16.mxu0 0
    %683 = vmatpush1.bf16.msra.mxu0 %v606
    %684 = vmatprep.subr.bf16.mxu0 0
    %685 = vmatpush1.bf16.msra.mxu0 %v607
    %686 = vmatprep.subr.bf16.mxu0 0
    %687 = vmatpush1.bf16.msra.mxu0 %v608
    %688 = vmatprep.subr.bf16.mxu0 0
    %689 = vmatpush1.bf16.msra.mxu0 %v609
    %690 = vmatprep.mubr.bf16.mxu0 %v392
    %691 = vmatmul.mubr.bf16.gmra.mrb[0].mxu0 %v391
    %v692 = vpop.f32.mrb[0].mxu0
    %v693 = vadd.f32 %v464, %v692
    %v694 = vpop.f32.mrb[0].mxu0
    %v695 = vpop.f32.mrb[0].mxu0
    %v696 = vadd.f32 %v464, %v695
    %v697 = vpop.f32.mrb[0].mxu0
    %698 = vdwg.mxu0
    %699 = vmatprep.subr.bf16.mxu0 0
    %700 = vmatpush1.bf16.msra.mxu0 %v610
    %701 = vmatprep.subr.bf16.mxu0 0
    %702 = vmatpush1.bf16.msra.mxu0 %v611
    %703 = vmatprep.subr.bf16.mxu0 0
    %704 = vmatpush1.bf16.msra.mxu0 %v612
    %705 = vmatprep.subr.bf16.mxu0 0
    %706 = vmatpush1.bf16.msra.mxu0 %v613
    %707 = vmatprep.subr.bf16.mxu0 0
    %708 = vmatpush1.bf16.msra.mxu0 %v614
    %709 = vmatprep.subr.bf16.mxu0 0
    %710 = vmatpush1.bf16.msra.mxu0 %v615
    %711 = vmatprep.subr.bf16.mxu0 0
    %712 = vmatpush1.bf16.msra.mxu0 %v616
    %713 = vmatprep.subr.bf16.mxu0 0
    %714 = vmatpush1.bf16.msra.mxu0 %v617
    %715 = vmatprep.subr.bf16.mxu0 0
    %716 = vmatpush1.bf16.msra.mxu0 %v618
    %717 = vmatprep.subr.bf16.mxu0 0
    %718 = vmatpush1.bf16.msra.mxu0 %v619
    %719 = vmatprep.subr.bf16.mxu0 0
    %720 = vmatpush1.bf16.msra.mxu0 %v620
    %721 = vmatprep.subr.bf16.mxu0 0
    %722 = vmatpush1.bf16.msra.mxu0 %v621
    %723 = vmatprep.subr.bf16.mxu0 0
    %724 = vmatpush1.bf16.msra.mxu0 %v622
    %725 = vmatprep.subr.bf16.mxu0 0
    %726 = vmatpush1.bf16.msra.mxu0 %v623
    %727 = vmatprep.subr.bf16.mxu0 0
    %728 = vmatpush1.bf16.msra.mxu0 %v624
    %729 = vmatprep.subr.bf16.mxu0 0
    %730 = vmatpush1.bf16.msra.mxu0 %v625
    %731 = vmatprep.mubr.bf16.mxu0 %v394
    %732 = vmatmul.mubr.bf16.gmra.mrb[0].mxu0 %v393
    %v733 = vpop.f32.mrb[0].mxu0
    %v734 = vadd.f32 %v693, %v733
    %v735 = vpop.f32.mrb[0].mxu0
    %v736 = vpop.f32.mrb[0].mxu0
    %v737 = vadd.f32 %v696, %v736
    %v738 = vpop.f32.mrb[0].mxu0
    %739 = vdwg.mxu0
    %v740 = vmax.f32 %v734, 0.0
    %v741 = vmax.f32 %v737, 0.0
    %v742 = vpack.c.bf16 %v741, %v740
    %v743 = vld [vmem:[%s7] sm:$0xf]
    %v744 = vld [vmem:[%s7 + $0x4] sm:$0xf]
    %v745 = vld [vmem:[%s7 + $0x8] sm:$0xf]
    %v746 = vld [vmem:[%s7 + $0xc] sm:$0xf]
    %v747 = vld [vmem:[%s7 + $0x10] sm:$0xf]
    %v748 = vld [vmem:[%s7 + $0x14] sm:$0xf]
    %v749 = vld [vmem:[%s7 + $0x18] sm:$0xf]
    %v750 = vld [vmem:[%s7 + $0x1c] sm:$0xf]
    %v751 = vld [vmem:[%s7 + $0x20] sm:$0xf]
    %v752 = vld [vmem:[%s7 + $0x24] sm:$0xf]
    %v753 = vld [vmem:[%s7 + $0x28] sm:$0xf]
    %v754 = vld [vmem:[%s7 + $0x2c] sm:$0xf]
    %v755 = vld [vmem:[%s7 + $0x30] sm:$0xf]
    %v756 = vld [vmem:[%s7 + $0x34] sm:$0xf]
    %v757 = vld [vmem:[%s7 + $0x38] sm:$0xf]
    %v758 = vld [vmem:[%s7 + $0x3c] sm:$0xf]
    %v759 = vld [vmem:[%s8] sm:$0x1]
    %v761 = vlaneseq
    %v762 = vshrl.u32 %v761, 7
    %v763 = vsub.s32 0, %v762
    %v764 = vrot.slane %v759, %v763
    %v782 = vunpack.c.l.b16 %v743
    %v783 = vunpack.c.l.b16 %v744
    %v784 = vunpack.c.l.b16 %v745
    %v785 = vunpack.c.l.b16 %v746
    %v786 = vunpack.c.l.b16 %v747
    %v787 = vunpack.c.l.b16 %v748
    %v788 = vunpack.c.l.b16 %v749
    %v789 = vunpack.c.l.b16 %v750
    %v790 = vunpack.c.l.b16 %v751
    %v791 = vunpack.c.l.b16 %v752
    %v792 = vunpack.c.l.b16 %v753
    %v793 = vunpack.c.l.b16 %v754
    %v794 = vunpack.c.l.b16 %v755
    %v795 = vunpack.c.l.b16 %v756
    %v796 = vunpack.c.l.b16 %v757
    %v797 = vunpack.c.l.b16 %v758
    %v798 = vpack.c.b16 %v783, %v782
    %v799 = vpack.c.b16 %v785, %v784
    %v800 = vpack.c.b16 %v787, %v786
    %v801 = vpack.c.b16 %v789, %v788
    %v802 = vpack.c.b16 %v791, %v790
    %v803 = vpack.c.b16 %v793, %v792
    %v804 = vpack.c.b16 %v795, %v794
    %v805 = vpack.c.b16 %v797, %v796
    %814 = vmatprep.subr.bf16.mxu0 0
    %815 = vmatpush1.bf16.msra.mxu0 %v798
    %816 = vmatprep.subr.bf16.mxu0 0
    %817 = vmatpush1.bf16.msra.mxu0 %v799
    %818 = vmatprep.subr.bf16.mxu0 0
    %819 = vmatpush1.bf16.msra.mxu0 %v800
    %820 = vmatprep.subr.bf16.mxu0 0
    %821 = vmatpush1.bf16.msra.mxu0 %v801
    %822 = vmatprep.subr.bf16.mxu0 0
    %823 = vmatpush1.bf16.msra.mxu0 %v802
    %824 = vmatprep.subr.bf16.mxu0 0
    %825 = vmatpush1.bf16.msra.mxu0 %v803
    %826 = vmatprep.subr.bf16.mxu0 0
    %827 = vmatpush1.bf16.msra.mxu0 %v804
    %828 = vmatprep.subr.bf16.mxu0 0
    %829 = vmatpush1.bf16.msra.mxu0 %v805
    %830 = vmatprep.subr.bf16.mxu0 0
    %831 = vmatpush1.bf16.msra.mxu0 0
    %832 = vmatprep.subr.bf16.mxu0 0
    %833 = vmatpush1.bf16.msra.mxu0 0
    %834 = vmatprep.subr.bf16.mxu0 0
    %835 = vmatpush1.bf16.msra.mxu0 0
    %836 = vmatprep.subr.bf16.mxu0 0
    %837 = vmatpush1.bf16.msra.mxu0 0
    %838 = vmatprep.subr.bf16.mxu0 0
    %839 = vmatpush1.bf16.msra.mxu0 0
    %840 = vmatprep.subr.bf16.mxu0 0
    %841 = vmatpush1.bf16.msra.mxu0 0
    %842 = vmatprep.subr.bf16.mxu0 0
    %843 = vmatpush1.bf16.msra.mxu0 0
    %844 = vmatprep.subr.bf16.mxu0 0
    %845 = vmatpush1.bf16.msra.mxu0 0
    %846 = vmatprep.mubr.bf16.mxu0 0
    %847 = vmatmul.mubr.bf16.gmra.mrb[0].mxu0 %v742
    %v848 = vpop.f32.mrb[0].mxu0
    %v849 = vadd.f32 %v764, %v848
    %v850 = vpop.f32.mrb[0].mxu0
    %v851 = vpop.f32.mrb[0].mxu0
    %v852 = vadd.f32 %v764, %v851
    %v853 = vpop.f32.mrb[0].mxu0
    %854 = vdwg.mxu0
    %v855 = vmax.f32 %v849, 0.0
    %v856 = vmax.f32 %v852, 0.0
    %v857 = vld [vmem:[%s9] sm:$0x1]
    %v859 = vlaneseq
    %v860 = vshrl.u32 %v859, 7
    %v861 = vsub.s32 0, %v860
    %v862 = vrot.slane %v857, %v861
    %v864 = vmul.f32 %v855, %v862
    %v865 = vmul.f32 %v856, %v862
    %vm866 = vcmask 261120
    %v867 = vsel %vm866, %v864, 0.0
    %868 = vadd.xlane.f32.xlu0 %v867
    %v869 = vpop.xlane.xlu0 %868
    %v870 = vsel %vm866, %v865, 0.0
    %871 = vadd.xlane.f32.xlu0 %v870
    %v872 = vpop.xlane.xlu0 %871
    %v873 = vld [vmem:[#allocation2] sm:$0x1]
    %v875 = vlaneseq
    %v876 = vshrl.u32 %v875, 7
    %v877 = vsub.s32 0, %v876
    %v878 = vrot.slane %v873, %v877
    %v880 = vadd.f32 %v869, %v878
    %v881 = vadd.f32 %v872, %v878
    %vm882 = vcmask 7168
    %883 = vst.msk [vmem:[%s11] sm:$0xff] %vm882, %v880
    %884 = vst.msk [vmem:[%s11 + $0x8] sm:$0xff] %vm882, %v881
    // Predicated region
    $region58: #{tpu_custom_call.1} parent=1 // pred_check
      _
    $region59: #{tpu_custom_call.1} parent=1 // pred_check_branch
      %886 = sbr.rel (0) target = $region61
    $region60: #{tpu_custom_call.1} parent=1 // pred_region
      _
    $region61: #{tpu_custom_call.1} parent=1 // pred_fallthru
      _
    // Predicated region
    $region62: #{tpu_custom_call.1} parent=1 // pred_check
      _
    $region63: #{tpu_custom_call.1} parent=1 // pred_check_branch
      %888 = sbr.rel (0) target = $region65
    $region64: #{tpu_custom_call.1} parent=1 // pred_region
      _
    $region65: #{tpu_custom_call.1} parent=1 // pred_fallthru
      _
    %889 = vsyncpa [#allocation4], 1
    %890 = vsyncpa [#allocation6], 1

</llo_original>
